<compile_context>
chip_gen: v5e
topology: v5e:2x2
jax: 0.10.0
libtpu: 0.0.40
codegen_flags: <defaults>
</compile_context>

<pallas_src>
import functools
import math
import re

import jax
import jax.numpy as jnp
from jax.experimental import pallas as pl
from jax.experimental.pallas import tpu as pltpu

_SQRT_2_OVER_PI = math.sqrt(2.0 / math.pi)
_GELU_C = 0.044715
_INNER_B = _SQRT_2_OVER_PI * _GELU_C
_LANE = 128


def _chip_generation():
    """Best-effort TPU generation (5 / 6 / 7); defaults to 6 if unknown."""
    try:
        kind = jax.devices()[0].device_kind.lower()   # "TPU v5 lite", "TPU v6e", "TPU7x", ...
        m = re.search(r"(\d+)", kind)
        if m:
            return int(m.group(1))
    except Exception:
        pass
    return 6


def _target_block_bytes(gen):
    # Live VMEM = 2 (double-buffer) x 2 (in + out) x block.
    if gen >= 7:
        return 8 << 20    # 32 MiB live; vmem_limit raised below (64 MiB physical)
    if gen == 6:
        return 4 << 20    # 16 MiB live, inside 32 MiB scoped default
    return 2 << 20        # 8 MiB live, inside v5e's 16 MiB scoped default


def _gelu_kernel(x_ref, o_ref, *, compute_dtype):
    x = x_ref[...].astype(compute_dtype)
    # 0.5*x*(1+tanh(sqrt(2/pi)*(x + c*x^3))) == 0.5*x*(1+tanh(x*(A + B*x^2)))
    # with A = sqrt(2/pi), B = A*c -> one fewer VPU multiply per element.
    inner = x * (_SQRT_2_OVER_PI + _INNER_B * (x * x))
    y = 0.5 * x * (1.0 + jnp.tanh(inner))
    o_ref[...] = y.astype(o_ref.dtype)


def _choose_cols(n):
    """Largest lane-dense column width (multiple of 128) that divides n."""
    for c in (2048, 1024, 512, 256, 128):
        if n % c == 0:
            return c
    return None


def _gelu_2d(x2, gen):
    """Run the kernel on a lane-dense (rows, cols) view (cols % 128 == 0)."""
    rows, cols = x2.shape
    itemsize = jnp.dtype(x2.dtype).itemsize
    # dtype-native packed sublane tile: 8 for f32, 16 for bf16, 32 for int8/fp8
    sublane = max(8, 32 // itemsize)

    block_bytes = _target_block_bytes(gen)
    tile_r = max(1, block_bytes // (cols * itemsize))

    # Keep >= 8 grid steps for arrays worth pipelining so the "parallel" axis
    # shards across v7x's 2 TensorCores and in/out DMAs overlap compute.
    total_bytes = rows * cols * itemsize
    if total_bytes > (4 << 20):
        tile_r = min(tile_r, pl.cdiv(rows, 8))

    if tile_r >= rows:
        tile_r = rows
    else:
        tile_r = max(sublane, (tile_r // sublane) * sublane)

    grid = (pl.cdiv(rows, tile_r),)

    # bf16 compute on v6e/v7x only (v5e has no bf16 VPU/EUP).
    if x2.dtype == jnp.bfloat16 and gen >= 6:
        compute_dtype = jnp.bfloat16
    else:
        compute_dtype = jnp.float32

    n = rows * cols
    cost = pl.CostEstimate(
        flops=7 * n,
        transcendentals=n,
        bytes_accessed=2 * n * itemsize,
    )

    cp_kwargs = dict(dimension_semantics=("parallel",))
    if gen >= 7:
        # 32 MiB live buffers hit the 32 MiB scoped default on v7x; raise it
        # (physical VMEM per TC is 64 MiB) with headroom for internal scratch.
        cp_kwargs["vmem_limit_bytes"] = 48 << 20

    return pl.pallas_call(
        functools.partial(_gelu_kernel, compute_dtype=compute_dtype),
        out_shape=jax.ShapeDtypeStruct((rows, cols), x2.dtype),
        grid_spec=pltpu.PrefetchScalarGridSpec(
            num_scalar_prefetch=0,
            grid=grid,
            in_specs=[pl.BlockSpec((tile_r, cols), lambda i: (i, 0))],
            out_specs=pl.BlockSpec((tile_r, cols), lambda i: (i, 0)),
        ),
        compiler_params=pltpu.CompilerParams(**cp_kwargs),
        cost_estimate=cost,
    )(x2)


def _gelu_jnp(x):
    """Reference tanh-GELU in plain jnp (also used for tiny tails)."""
    xf = x.astype(jnp.float32)
    y = 0.5 * xf * (1.0 + jnp.tanh(_SQRT_2_OVER_PI * (xf + _GELU_C * xf ** 3)))
    return y.astype(x.dtype)


def gelu_pallas(x):
    """Elementwise tanh-GELU on any shape; hot path is a Pallas kernel."""
    orig_shape = x.shape
    n = x.size
    if n == 0:
        return x

    gen = _chip_generation()
    flat = x.reshape(-1)

    cols = _choose_cols(n)
    if cols is not None:
        out = _gelu_2d(flat.reshape(n // cols, cols), gen)
        return out.reshape(orig_shape)

    # Total size not a multiple of 128: run the kernel on the leading
    # 128-aligned chunk and finish the (<128-element) tail in plain jnp.
    n_main = (n // _LANE) * _LANE
    if n_main == 0:
        return _gelu_jnp(x)
    cols = _choose_cols(n_main)
    head = _gelu_2d(flat[:n_main].reshape(n_main // cols, cols), gen)
    tail = _gelu_jnp(flat[n_main:])
    return jnp.concatenate([head.reshape(-1), tail]).reshape(orig_shape)


if __name__ == "__main__":
    key = jax.random.PRNGKey(0)
    # Small ViT-like MLP activation: (batch=2, seq=8, hidden=32)
    x = jax.random.normal(key, (2, 8, 32), dtype=jnp.float32)

    out = jax.block_until_ready(gelu_pallas(x))
    ref = _gelu_jnp(x)
    assert out.shape == x.shape and out.dtype == x.dtype
    assert jnp.allclose(out, ref, atol=1e-5, rtol=1e-5)

    # bf16 input (bf16 compute on v6e/v7x, f32 on older chips).
    xb = x.astype(jnp.bfloat16)
    out_b = jax.block_until_ready(gelu_pallas(xb))
    ref_b = _gelu_jnp(xb)
    assert out_b.dtype == xb.dtype
    assert jnp.allclose(out_b.astype(jnp.float32), ref_b.astype(jnp.float32),
                        atol=5e-2, rtol=5e-2)

    # Non-multiple-of-128 total size exercises the cheap tail fallback.
    x_odd = jax.random.normal(jax.random.PRNGKey(1), (3, 5, 17),
                              dtype=jnp.float32)
    out_odd = jax.block_until_ready(gelu_pallas(x_odd))
    assert out_odd.shape == x_odd.shape
    assert jnp.allclose(out_odd, _gelu_jnp(x_odd), atol=1e-5, rtol=1e-5)

    print("KERNEL_OK")
</pallas_src>

<mosaic_0001>
module attributes {stable_mosaic.version = 11 : i64} {
  func.func @_gelu_kernel(%arg0: i32, %arg1: memref<1x512xf32, #tpu.memory_space<vmem>>, %arg2: memref<1x512xf32, #tpu.memory_space<vmem>>) attributes {dimension_semantics = [#tpu.dimension_semantics<parallel>], iteration_bounds = array<i64: 1>, scalar_prefetch = 0 : i64, scratch_operands = 0 : i64, tpu.core_type = #tpu.core_type<tc>, window_params = [{transform_indices = @transform_0, window_bounds = array<i64: 1, 512>}, {transform_indices = @transform_1, window_bounds = array<i64: 1, 512>}]} {
    %c0 = arith.constant 0 : index
    %c0_0 = arith.constant 0 : index
    %0 = vector.load %arg1[%c0, %c0_0] : memref<1x512xf32, #tpu.memory_space<vmem>>, vector<1x512xf32>
    %1 = arith.mulf %0, %0 : vector<1x512xf32>
    %cst = arith.constant 0.0356774069 : f32
    %2 = vector.broadcast %cst : f32 to vector<1x512xf32>
    %3 = arith.mulf %2, %1 : vector<1x512xf32>
    %cst_1 = arith.constant 0.797884583 : f32
    %4 = vector.broadcast %cst_1 : f32 to vector<1x512xf32>
    %5 = arith.addf %4, %3 : vector<1x512xf32>
    %6 = arith.mulf %0, %5 : vector<1x512xf32>
    %cst_2 = arith.constant 5.000000e-01 : f32
    %7 = vector.broadcast %cst_2 : f32 to vector<1x512xf32>
    %8 = arith.mulf %7, %0 : vector<1x512xf32>
    %9 = math.tanh %6 : vector<1x512xf32>
    %cst_3 = arith.constant 1.000000e+00 : f32
    %10 = vector.broadcast %cst_3 : f32 to vector<1x512xf32>
    %11 = arith.addf %10, %9 : vector<1x512xf32>
    %12 = arith.mulf %8, %11 : vector<1x512xf32>
    %c0_4 = arith.constant 0 : index
    %c0_5 = arith.constant 0 : index
    %13 = vector.load %arg2[%c0_4, %c0_5] : memref<1x512xf32, #tpu.memory_space<vmem>>, vector<1x512xf32>
    tpu.vector_store %arg2[%c0_4, %c0_5], %12 {strides = array<i32>} : memref<1x512xf32, #tpu.memory_space<vmem>>, vector<1x512xf32>,
    return
  }
  func.func @transform_0(%arg0: i32) -> (i32, i32) {
    %c0_i32 = arith.constant 0 : i32
    %c0_i32_0 = arith.constant 0 : i32
    return %arg0, %c0_i32 : i32, i32
  }
  func.func @transform_1(%arg0: i32) -> (i32, i32) {
    %c0_i32 = arith.constant 0 : i32
    %c0_i32_0 = arith.constant 0 : i32
    return %arg0, %c0_i32 : i32, i32
  }
}

</mosaic_0001>

<llo_original>
// kernel: tpu_custom_call.1
$region0: #{tpu_custom_call.1}
  #allocation0 [shape = 'u32[]', space=smem, size = 0x4, offset = 0x4, fixed_abs, tag = 'smem constant byte address 0x4 - core index']
  #allocation1 [shape = 'u32[72,128]{1,0:T(1,128)}', space=vmem, size = 0x9000, scoped, tag = 'internal scratch']
  %s0 = inlined_call_operand.hbm [shape: f32[1,512], index: 0, kind: input, shape index: {}]
  %s1 = inlined_call_operand.hbm [shape: f32[1,512], index: 1, kind: output, shape index: {}]
  %s2 = sld [smem:[#allocation0]]
  $region18: #{tpu_custom_call.1} parent=0
    _
  %s4 = ssub.s32 1, %s2
  %s5 = scalar_select 0, %s4, %s2
  $region1: #{tpu_custom_call.1} parent=0
    #allocation2 [shape = 'u8[2048]{0}', space=vmem, size = 0x800, scoped, tag = 'input window, operand 0, single buffered']
    #allocation3 [shape = 's32[1]{0}', space=sflag, size = 0x4, scoped, tag = 'scoped memory for tpu_custom_call.1']
    #allocation4 [shape = 's32[1]{0}', space=sflag, size = 0x4, scoped, tag = 'scoped memory for tpu_custom_call.1']
    #allocation5 [shape = 'u8[2048]{0}', space=vmem, size = 0x800, scoped, tag = 'output window, operand 0, single buffered']
    %6 = vsyncpa [#allocation3], 0
    %7 = vsyncpa [#allocation4], 0
    // Predicated region
    $region2: #{tpu_custom_call.1} parent=1 // pred_check
      _
    $region3: #{tpu_custom_call.1} parent=1 // pred_check_branch
      %9 = sbr.rel (0) target = $region5
    $region4: #{tpu_custom_call.1} parent=1 // pred_region
      %11 = vsyncadd [#allocation3], 0
      %s13 = sshll.u32 %s0, 4
      %s14 = int_to_ptr.hbm [resolvable:$true] %s13
      %s15 = sshll.u32 [#allocation2], 4
      %s16 = int_to_ptr.vmem [resolvable:$true] %s15
      %18 = dma.hbm_to_vmem [thread:$0]  %s14, 64, %s16, [#allocation3]
    $region5: #{tpu_custom_call.1} parent=1 // pred_fallthru
      _
    // Predicated region
    $region6: #{tpu_custom_call.1} parent=1 // pred_check
      _
    $region7: #{tpu_custom_call.1} parent=1 // pred_check_branch
      %20 = sbr.rel (0) target = $region9
    $region8: #{tpu_custom_call.1} parent=1 // pred_region
      %22 = dma.done [#allocation3], 64
    $region9: #{tpu_custom_call.1} parent=1 // pred_fallthru
      _
    %v23 = vld [vmem:[#allocation2] sm:$0xf]
    %v24 = vmul.f32 %v23, %v23
    %v25 = vmul.f32 %v24, 0.035677407
    %v26 = vadd.f32 %v25, 0.7978846
    %v27 = vmul.f32 %v23, %v26
    %v28 = vmul.f32 %v23, 0.5
    %v29 = vtanh.pop %v27
    %v30 = vadd.f32 %v29, 1.0
    %v31 = vmul.f32 %v28, %v30
    %v32 = vlaneseq
    %vm33 = vcmp.ge.s32.totalorder %v32, 0
    %vm34 = vcmp.lt.s32.totalorder %v32, 512
    %vm35 = vmand %vm33, %vm34
    %36 = vst.msk [vmem:[#allocation5] sm:$0xf] %vm35, %v31
    // Predicated region
    $region10: #{tpu_custom_call.1} parent=1 // pred_check
      _
    $region11: #{tpu_custom_call.1} parent=1 // pred_check_branch
      %38 = sbr.rel (0) target = $region13
    $region12: #{tpu_custom_call.1} parent=1 // pred_region
      %40 = vsyncadd [#allocation4], 0
      %s42 = sshll.u32 [#allocation5], 4
      %s43 = int_to_ptr.vmem [resolvable:$true] %s42
      %s44 = sshll.u32 %s1, 4
      %s45 = int_to_ptr.hbm [resolvable:$true] %s44
      %47 = dma.vmem_to_hbm [thread:$0]  %s43, 64, %s45, [#allocation4]
    $region13: #{tpu_custom_call.1} parent=1 // pred_fallthru
      _
    // Predicated region
    $region14: #{tpu_custom_call.1} parent=1 // pred_check
      _
    $region15: #{tpu_custom_call.1} parent=1 // pred_check_branch
      %49 = sbr.rel (0) target = $region17
    $region16: #{tpu_custom_call.1} parent=1 // pred_region
      %51 = dma.done [#allocation4], 64
    $region17: #{tpu_custom_call.1} parent=1 // pred_fallthru
      _
    %52 = vsyncpa [#allocation3], 1
    %53 = vsyncpa [#allocation4], 1

</llo_original>
